<compile_context>
chip_gen: v5e
topology: v5e:2x2
jax: 0.10.0
libtpu: 0.0.40
codegen_flags: <defaults>
</compile_context>

<pallas_src>
import functools

import jax
import jax.numpy as jnp
from jax.experimental import pallas as pl
from jax.experimental.pallas import tpu as pltpu


def _round_up(x, m):
    return (x + m - 1) // m * m


def _fold_to_128(x, nb):
    """Fold a lane-dense (1, nb) f32 array down to (1, 128) partial sums.

    nb is a multiple of 128; the wrapper guarantees nb % 1024 == 0 when
    nb > 1024 and nb % 8192 == 0 when nb > 8192, so the staged fold stays at
    O(nb/8192 + 16) traced adds even for very large tiles.
    """
    for w in (8192, 1024, 128):
        if nb > w:
            acc = x[:, 0:w]
            for r in range(1, nb // w):
                acc = acc + x[:, r * w:(r + 1) * w]
            x, nb = acc, w
    return x


def _accuracy_kernel(*refs, topk, n_total, n_blk, has_weights, has_mask,
                     needs_valid, widen):
    it = iter(refs)
    gt_ref = next(it)                           # (1, 1, NB)  int8 / int32
    pred_ref = next(it)                         # (1, C, NB)  native dtype
    w_ref = next(it) if has_weights else None   # (1, 1, NB)  native float
    m_ref = next(it) if has_mask else None      # (1, 1, NB)  int8 {0, 1}
    out_ref = next(it)                          # (1, 1, 2, 128) f32: [num, den]

    pred = pred_ref[...]
    if widen:                                   # bf16 / f32 stay native
        pred = pred.astype(jnp.float32)
    gt = gt_ref[...].astype(jnp.int32)          # (1, 1, NB)
    _, C, NB = pred.shape

    # ---- rank-count top-k: single pass, fused channel reduce --------------
    # rank(gt) = #{c: pred[c] > pred[gt]} + #{c < gt: pred[c] == pred[gt]}
    # correct  = rank < k      (ties break toward the lower channel index)
    ch = jax.lax.broadcasted_iota(jnp.int32, (1, C, 1), 1)            # lane-splat
    is_gt = ch == gt                                                   # (1, C, NB)
    pred_gt = jnp.sum(jnp.where(is_gt, pred, jnp.zeros((), pred.dtype)),
                      axis=1, keepdims=True)                           # exact
    beats_gt = (pred > pred_gt) | ((pred == pred_gt) & (ch < gt))      # (1, C, NB)
    rank = jnp.sum(beats_gt.astype(jnp.int32), axis=1)                 # (1, NB)
    correct = (rank < topk).astype(jnp.float32)                        # (1, NB)

    if has_weights:
        correct = correct * w_ref[0].astype(jnp.float32)

    if has_mask:
        m = m_ref[0].astype(jnp.float32)
        num_c = correct * m
        den_c = m
    else:
        num_c = correct
        den_c = None                            # constant NB, emitted below

    if needs_valid:                             # remainder / padded lanes only
        lane = (jax.lax.broadcasted_iota(jnp.int32, (1, NB), 1)
                + pl.program_id(1) * n_blk)
        valid = lane < n_total
        num_c = jnp.where(valid, num_c, 0.0)
        den_c = (jnp.where(valid, den_c, 0.0) if has_mask
                 else valid.astype(jnp.float32))

    num_p = _fold_to_128(num_c, NB)
    if den_c is None:
        den_p = jnp.full((1, 128), NB // 128, dtype=jnp.float32)
    else:
        den_p = _fold_to_128(den_c, NB)
    out_ref[...] = jnp.concatenate([num_p, den_p], axis=0).reshape(1, 1, 2, 128)


def accuracy(gt, pred, weights=None, mask=None, *, topk=1):
    """gt: [B, *spatial] int labels; pred: [B, C, *spatial] logits.
    Returns the scalar f32 (weighted / masked) top-k accuracy."""
    b = pred.shape[0]
    c = pred.shape[1]
    n = 1
    for d in pred.shape[2:]:
        n *= d

    pred_dt = jnp.dtype(pred.dtype)
    widen = pred_dt not in (jnp.dtype(jnp.bfloat16), jnp.dtype(jnp.float32))
    gt_dtype = jnp.int8 if c <= 127 else jnp.int32     # shrink the gt stream

    pred3 = pred.reshape(b, c, n)                       # native dtype, no copy
    gt3 = gt.reshape(b, 1, n).astype(gt_dtype)
    w3 = weights.reshape(b, 1, n) if weights is not None else None
    m3 = mask.reshape(b, 1, n).astype(jnp.int8) if mask is not None else None
    has_weights = w3 is not None
    has_mask = m3 is not None
    topk_eff = max(1, min(int(topk), c))

    # ---- per-generation VMEM budget (v7x TC has only 64 MiB) --------------
    try:
        vmem_cap = int(getattr(pltpu.get_tpu_info(), "vmem_capacity_bytes",
                               64 * 1024 * 1024))
    except Exception:
        vmem_cap = 64 * 1024 * 1024
    if vmem_cap >= 96 * 1024 * 1024:                    # v5e / v6e (128 MiB)
        budget, vmem_limit = 32 * 1024 * 1024, 64 * 1024 * 1024
    else:                                               # v7x (64 MiB) / unknown
        budget, vmem_limit = 18 * 1024 * 1024, 32 * 1024 * 1024

    pred_isz = pred_dt.itemsize
    gt_isz = jnp.dtype(gt_dtype).itemsize
    w_isz = jnp.dtype(w3.dtype).itemsize if has_weights else 0
    m_isz = 1 if has_mask else 0
    stream = 2 * (c * pred_isz + gt_isz + w_isz + m_isz)   # double-buffered DMA
    work = 2 * c * (4 if widen else pred_isz) + 48          # live intermediates
    bytes_per_lane = stream + work
    max_blk = min(max(128, budget // bytes_per_lane), 256 * 1024)

    if n <= min(max_blk, 1024):
        # Single (possibly padded) block; padding is cheap at this size.
        n_blk = _round_up(n, 128)
        pad = n_blk - n
        if pad:
            pred3 = jnp.pad(pred3, ((0, 0), (0, 0), (0, pad)))
            gt3 = jnp.pad(gt3, ((0, 0), (0, 0), (0, pad)))
            if has_weights:
                w3 = jnp.pad(w3, ((0, 0), (0, 0), (0, pad)))
            if has_mask:
                m3 = jnp.pad(m3, ((0, 0), (0, 0), (0, pad)))
    else:
        target = min(n, max_blk)
        if b == 1 and n > 16384:
            # Keep >= 2 spatial tiles so both v7x TensorCores get work.
            target = min(target, -(-n // 2))
        if target >= 8192:
            n_blk = target // 8192 * 8192
        elif target >= 1024:
            n_blk = target // 1024 * 1024
        else:
            n_blk = max(128, target // 128 * 128)

    n_arr = pred3.shape[-1]
    grid_n = pl.cdiv(n_arr, n_blk)
    needs_valid = (grid_n * n_blk != n)        # remainder tile or padded lanes

    inputs = [gt3, pred3]
    in_specs = [
        pl.BlockSpec((1, 1, n_blk), lambda bi, ni: (bi, 0, ni)),
        pl.BlockSpec((1, c, n_blk), lambda bi, ni: (bi, 0, ni)),
    ]
    if has_weights:
        inputs.append(w3)
        in_specs.append(pl.BlockSpec((1, 1, n_blk), lambda bi, ni: (bi, 0, ni)))
    if has_mask:
        inputs.append(m3)
        in_specs.append(pl.BlockSpec((1, 1, n_blk), lambda bi, ni: (bi, 0, ni)))

    kernel = functools.partial(
        _accuracy_kernel,
        topk=topk_eff,
        n_total=n,
        n_blk=n_blk,
        has_weights=has_weights,
        has_mask=has_mask,
        needs_valid=needs_valid,
        widen=widen,
    )

    parts = pl.pallas_call(
        kernel,
        out_shape=jax.ShapeDtypeStruct((b, grid_n, 2, 128), jnp.float32),
        grid=(b, grid_n),
        in_specs=in_specs,
        out_specs=pl.BlockSpec((1, 1, 2, 128), lambda bi, ni: (bi, ni, 0, 0)),
        compiler_params=pltpu.CompilerParams(
            dimension_semantics=("parallel", "parallel"),
            vmem_limit_bytes=int(vmem_limit),
        ),
    )(*inputs)

    # Tiny final reduce + divide outside the kernel (negligible vs. the stream).
    sums = parts.sum(axis=(0, 1, 3))            # (2,) = [numerator, denominator]
    return sums[0] / sums[1]


def _ref_accuracy(gt, pred, weights=None, mask=None, topk=1):
    """Pure-JAX reference mirroring the PyTorch module."""
    b, c = pred.shape[0], pred.shape[1]
    predf = pred.reshape(b, c, -1).astype(jnp.float32)
    gtf = gt.reshape(b, 1, -1)
    _, idx = jax.lax.top_k(jnp.moveaxis(predf, 1, -1), topk)    # (b, n, k)
    idx = jnp.moveaxis(idx, -1, 1)                              # (b, k, n)
    correct = (idx == gtf).sum(axis=1).astype(jnp.float32)      # (b, n)
    if weights is not None:
        correct = correct * weights.reshape(b, -1).astype(jnp.float32)
    if mask is not None:
        m = mask.reshape(b, -1).astype(jnp.float32)
        return (correct * m).sum() / m.sum()
    return correct.mean()


if __name__ == "__main__":
    key = jax.random.PRNGKey(0)
    k_gt, k_pred, k_w, k_m = jax.random.split(key, 4)

    B, C, H, W = 2, 4, 16, 16
    gt = jax.random.randint(k_gt, (B, H, W), 0, C, dtype=jnp.int32)
    pred = jax.random.normal(k_pred, (B, C, H, W), dtype=jnp.float32)
    weights = jax.random.uniform(k_w, (B, H, W), dtype=jnp.float32)
    mask = jax.random.uniform(k_m, (B, H, W)) > 0.3

    # top-1, no weights / mask (f32 path)
    out1 = jax.block_until_ready(accuracy(gt, pred, topk=1))
    ref1 = _ref_accuracy(gt, pred, topk=1)
    assert jnp.allclose(out1, ref1, atol=1e-5), (out1, ref1)

    # top-2 with weights and mask
    out2 = jax.block_until_ready(accuracy(gt, pred, weights=weights, mask=mask, topk=2))
    ref2 = _ref_accuracy(gt, pred, weights=weights, mask=mask, topk=2)
    assert jnp.allclose(out2, ref2, atol=1e-5), (out2, ref2)

    # bf16 predictions exercise the native-compare (no f32 widen) path
    pred_bf16 = pred.astype(jnp.bfloat16)
    out3 = jax.block_until_ready(accuracy(gt, pred_bf16, topk=1))
    ref3 = _ref_accuracy(gt, pred_bf16, topk=1)
    assert jnp.allclose(out3, ref3, atol=1e-5), (out3, ref3)

    print("KERNEL_OK")
</pallas_src>

<mosaic_0001>
module attributes {stable_mosaic.version = 11 : i64} {
  func.func @_accuracy_kernel(%arg0: i32, %arg1: i32, %arg2: memref<1x1x256xi8, #tpu.memory_space<vmem>>, %arg3: memref<1x4x256xf32, #tpu.memory_space<vmem>>, %arg4: memref<1x1x2x128xf32, #tpu.memory_space<vmem>>) attributes {dimension_semantics = [#tpu.dimension_semantics<parallel>, #tpu.dimension_semantics<parallel>], iteration_bounds = array<i64: 2, 1>, scalar_prefetch = 0 : i64, scratch_operands = 0 : i64, tpu.core_type = #tpu.core_type<tc>, window_params = [{transform_indices = @transform_0, window_bounds = array<i64: 1, 1, 256>}, {transform_indices = @transform_1, window_bounds = array<i64: 1, 4, 256>}, {transform_indices = @transform_2, window_bounds = array<i64: 1, 1, 2, 128>}]} {
    %c0 = arith.constant 0 : index
    %c0_0 = arith.constant 0 : index
    %c0_1 = arith.constant 0 : index
    %0 = vector.load %arg3[%c0, %c0_0, %c0_1] : memref<1x4x256xf32, #tpu.memory_space<vmem>>, vector<1x4x256xf32>
    %c0_2 = arith.constant 0 : index
    %c0_3 = arith.constant 0 : index
    %c0_4 = arith.constant 0 : index
    %1 = vector.load %arg2[%c0_2, %c0_3, %c0_4] : memref<1x1x256xi8, #tpu.memory_space<vmem>>, vector<1x1x256xi8>
    %2 = arith.extsi %1 : vector<1x1x256xi8> to vector<1x1x256xi32>
    %3 = tpu.iota {dimensions = array<i32: 1>} : vector<1x4x1xi32>
    %4 = vector.broadcast %3 : vector<1x4x1xi32> to vector<1x4x256xi32>
    %5 = vector.broadcast %2 : vector<1x1x256xi32> to vector<1x4x256xi32>
    %6 = arith.cmpi eq, %4, %5 : vector<1x4x256xi32>
    %cst = arith.constant 0.000000e+00 : f32
    %7 = vector.broadcast %cst : f32 to vector<1x4x256xf32>
    %8 = arith.select %6, %0, %7 : vector<1x4x256xi1>, vector<1x4x256xf32>
    %cst_5 = arith.constant dense<0.000000e+00> : vector<1x256xf32>
    %9 = vector.multi_reduction <add>, %8, %cst_5 [1] : vector<1x4x256xf32> to vector<1x256xf32>
    %10 = vector.shape_cast %9 : vector<1x256xf32> to vector<1x1x256xf32>
    %11 = vector.broadcast %10 : vector<1x1x256xf32> to vector<1x4x256xf32>
    %12 = arith.cmpf ogt, %0, %11 : vector<1x4x256xf32>
    %13 = vector.broadcast %10 : vector<1x1x256xf32> to vector<1x4x256xf32>
    %14 = arith.cmpf oeq, %0, %13 : vector<1x4x256xf32>
    %15 = vector.broadcast %3 : vector<1x4x1xi32> to vector<1x4x256xi32>
    %16 = vector.broadcast %2 : vector<1x1x256xi32> to vector<1x4x256xi32>
    %17 = arith.cmpi slt, %15, %16 : vector<1x4x256xi32>
    %18 = arith.andi %14, %17 : vector<1x4x256xi1>
    %19 = arith.ori %12, %18 : vector<1x4x256xi1>
    %20 = arith.extui %19 : vector<1x4x256xi1> to vector<1x4x256xi32>
    %cst_6 = arith.constant dense<0> : vector<1x256xi32>
    %21 = vector.multi_reduction <add>, %20, %cst_6 [1] : vector<1x4x256xi32> to vector<1x256xi32>
    %c1_i32 = arith.constant 1 : i32
    %22 = vector.broadcast %c1_i32 : i32 to vector<1x256xi32>
    %23 = arith.cmpi slt, %21, %22 : vector<1x256xi32>
    %24 = arith.extui %23 : vector<1x256xi1> to vector<1x256xi32>
    %25 = arith.sitofp %24 : vector<1x256xi32> to vector<1x256xf32>
    %26 = vector.extract_strided_slice %25 {offsets = [0, 0], sizes = [1, 128], strides = [1, 1]} : vector<1x256xf32> to vector<1x128xf32>
    %27 = vector.extract_strided_slice %25 {offsets = [0, 128], sizes = [1, 128], strides = [1, 1]} : vector<1x256xf32> to vector<1x128xf32>
    %28 = arith.addf %26, %27 : vector<1x128xf32>
    %cst_7 = arith.constant 2.000000e+00 : f32
    %29 = vector.broadcast %cst_7 : f32 to vector<1x128xf32>
    %30 = tpu.concatenate %28, %29 in 0 : vector<1x128xf32>, vector<1x128xf32> -> vector<2x128xf32>
    %31 = vector.shape_cast %30 : vector<2x128xf32> to vector<1x1x2x128xf32>
    %c0_8 = arith.constant 0 : index
    %c0_9 = arith.constant 0 : index
    %c0_10 = arith.constant 0 : index
    %c0_11 = arith.constant 0 : index
    %32 = vector.load %arg4[%c0_8, %c0_9, %c0_10, %c0_11] : memref<1x1x2x128xf32, #tpu.memory_space<vmem>>, vector<1x1x2x128xf32>
    tpu.vector_store %arg4[%c0_8, %c0_9, %c0_10, %c0_11], %31 {strides = array<i32>} : memref<1x1x2x128xf32, #tpu.memory_space<vmem>>, vector<1x1x2x128xf32>,
    return
  }
  func.func @transform_0(%arg0: i32, %arg1: i32) -> (i32, i32, i32) {
    %c0_i32 = arith.constant 0 : i32
    %c0_i32_0 = arith.constant 0 : i32
    return %arg0, %c0_i32, %arg1 : i32, i32, i32
  }
  func.func @transform_1(%arg0: i32, %arg1: i32) -> (i32, i32, i32) {
    %c0_i32 = arith.constant 0 : i32
    %c0_i32_0 = arith.constant 0 : i32
    return %arg0, %c0_i32, %arg1 : i32, i32, i32
  }
  func.func @transform_2(%arg0: i32, %arg1: i32) -> (i32, i32, i32, i32) {
    %c0_i32 = arith.constant 0 : i32
    %c0_i32_0 = arith.constant 0 : i32
    %c0_i32_1 = arith.constant 0 : i32
    return %arg0, %arg1, %c0_i32, %c0_i32_0 : i32, i32, i32, i32
  }
}

</mosaic_0001>

<llo_original>
// kernel: tpu_custom_call.1
$region0: #{tpu_custom_call.1}
  #allocation0 [shape = 'u32[]', space=smem, size = 0x4, offset = 0x4, fixed_abs, tag = 'smem constant byte address 0x4 - core index']
  #allocation1 [shape = 'u32[72,128]{1,0:T(1,128)}', space=vmem, size = 0x9000, scoped, tag = 'internal scratch']
  %s0 = inlined_call_operand.vmem [shape: s8[2,1,256], index: 0, kind: input, shape index: {}]
  %s1 = inlined_call_operand.hbm [shape: f32[2,4,256], index: 1, kind: input, shape index: {}]
  %s2 = inlined_call_operand.hbm [shape: f32[2,1,2,128], index: 2, kind: output, shape index: {}]
  %s3 = sld [smem:[#allocation0]]
  $region45: #{tpu_custom_call.1} parent=0
    _
  %s5 = ssub.s32 1, %s3
  %s6 = scalar_select 0, %s5, %s3
  $region1: #{tpu_custom_call.1} parent=0
    #allocation2 [shape = 'u8[8192]{0}', space=vmem, size = 0x2000, scoped, tag = 'input window, operand 1']
    #allocation3 [shape = 's32[2]{0}', space=sflag, size = 0x8, scoped, tag = 'scoped memory for tpu_custom_call.1']
    #allocation4 [shape = 's32[2]{0}', space=sflag, size = 0x8, scoped, tag = 'scoped memory for tpu_custom_call.1']
    #allocation5 [shape = 'u8[2048]{0}', space=vmem, size = 0x800, scoped, tag = 'output window, operand 0']
    %7 = vsyncpa [#allocation3], 0
    %s8 = scalar_lea.sflag [#allocation3], 1
    %9 = vsyncpa %s8, 0
    %10 = vsyncpa [#allocation4], 0
    %s11 = scalar_lea.sflag [#allocation4], 1
    %12 = vsyncpa %s11, 0
    loop: start=0, step=1, limit=4
    $region2: #{tpu_custom_call.1} parent=1 // loop_pre_header
      _
    $region3: #{tpu_custom_call.1} parent=1 // loop_header
      %s14 = sphi 0, %s18
      %p15 = scmp.ge.s32.totalorder %s14, 4
      %s21 = sphi 0, %s33
      %s22 = sphi 0, %s29
      %s23 = sphi 0, %s21
      %s24 = sphi 0, %s22
      %s25 = sphi 0, %s23
      %s26 = sphi 0, %s24
      %s38 = sphi 0, %s40
      %s41 = sphi 0, %s38
      %s42 = sphi 0, %s41
      %s58 = sphi 0, %s42
      %s66 = sphi 0, %s68
      %s69 = sphi 0, %s66
      %s70 = sphi 0, %s69
      %s86 = sphi 0, %s70
      %s94 = sphi 0, %s96
      %s97 = sphi 0, %s94
      %s98 = sphi 0, %s97
      %s114 = sphi 0, %s98
    $region4: #{tpu_custom_call.1} parent=1 // loop_header_branch
      %17 = sbr.rel (%p15) target = $region8
    $region5: #{tpu_custom_call.1} parent=1 // loop_body
      %s19 = ssub.s32 %s14, 1
      %s20 = ssub.s32 %s14, 2
      %s27 = sadd.s32 1, %s22
      %p28 = scmp.ge.s32.totalorder %s27, 1
      %s29 = scalar_select %p28, 0, %s27
      %s30 = sadd.s32 1, %s21
      %s31 = scalar_select %p28, %s30, %s21
      %p32 = scmp.ge.s32.totalorder %s31, 2
      %s33 = scalar_select %p32, 0, %s31
      %s34 = ssub.s32 %s21, %s33
      %s35 = ssub.s32 %s22, %s29
      %s36 = sor.u32 %s34, %s35
      %p37 = scmp.eq.s32.totalorder %s36, 0
      %s39 = sadd.s32 %s38, 1
      %s40 = scalar_select %p37, %s38, %s39
      %p43 = pneg %p37
      %p44 = scmp.eq.s32.totalorder %s14, 1
      %p45 = por %p43, %p44
      %p46 = scmp.ne.s32.totalorder %s38, %s41
      %p47 = scmp.eq.s32.totalorder %s14, 0
      %p48 = por %p46, %p47
      %p49 = scmp.ne.s32.totalorder %s38, %s41
      %p50 = scmp.eq.s32.totalorder %s19, 1
      %p51 = por %p49, %p50
      %p52 = scmp.ne.s32.totalorder %s41, %s42
      %p53 = scmp.eq.s32.totalorder %s19, 0
      %p54 = por %p52, %p53
      %p55 = scmp.ne.s32.totalorder %s41, %s42
      %p56 = scmp.eq.s32.totalorder %s20, 1
      %p57 = por %p55, %p56
      %p59 = scmp.ne.s32.totalorder %s42, %s58
      %p60 = scmp.eq.s32.totalorder %s20, 0
      %p61 = por %p59, %p60
      %s62 = ssub.s32 %s21, %s33
      %s63 = ssub.s32 %s22, %s29
      %s64 = sor.u32 %s62, %s63
      %p65 = scmp.eq.s32.totalorder %s64, 0
      %s67 = sadd.s32 %s66, 1
      %s68 = scalar_select %p65, %s66, %s67
      %p71 = pneg %p65
      %p72 = scmp.eq.s32.totalorder %s14, 1
      %p73 = por %p71, %p72
      %p74 = scmp.ne.s32.totalorder %s66, %s69
      %p75 = scmp.eq.s32.totalorder %s14, 0
      %p76 = por %p74, %p75
      %p77 = scmp.ne.s32.totalorder %s66, %s69
      %p78 = scmp.eq.s32.totalorder %s19, 1
      %p79 = por %p77, %p78
      %p80 = scmp.ne.s32.totalorder %s69, %s70
      %p81 = scmp.eq.s32.totalorder %s19, 0
      %p82 = por %p80, %p81
      %p83 = scmp.ne.s32.totalorder %s69, %s70
      %p84 = scmp.eq.s32.totalorder %s20, 1
      %p85 = por %p83, %p84
      %p87 = scmp.ne.s32.totalorder %s70, %s86
      %p88 = scmp.eq.s32.totalorder %s20, 0
      %p89 = por %p87, %p88
      %s90 = ssub.s32 %s21, %s33
      %s91 = ssub.s32 %s22, %s29
      %s92 = sor.u32 %s90, %s91
      %p93 = scmp.eq.s32.totalorder %s92, 0
      %s95 = sadd.s32 %s94, 1
      %s96 = scalar_select %p93, %s94, %s95
      %p99 = pneg %p93
      %p100 = scmp.eq.s32.totalorder %s14, 1
      %p101 = por %p99, %p100
      %p102 = scmp.ne.s32.totalorder %s94, %s97
      %p103 = scmp.eq.s32.totalorder %s14, 0
      %p104 = por %p102, %p103
      %p105 = scmp.ne.s32.totalorder %s94, %s97
      %p106 = scmp.eq.s32.totalorder %s19, 1
      %p107 = por %p105, %p106
      %p108 = scmp.ne.s32.totalorder %s97, %s98
      %p109 = scmp.eq.s32.totalorder %s19, 0
      %p110 = por %p108, %p109
      %p111 = scmp.ne.s32.totalorder %s97, %s98
      %p112 = scmp.eq.s32.totalorder %s20, 1
      %p113 = por %p111, %p112
      %p115 = scmp.ne.s32.totalorder %s98, %s114
      %p116 = scmp.eq.s32.totalorder %s20, 0
      %p117 = por %p115, %p116
      %p118 = scmp.le.s32.totalorder 1, %s14
      %p119 = scmp.lt.s32.totalorder %s14, 3
      %p120 = pnand %p118, %p119
      %p121 = pneg %p120
      // Predicated region
      $region9: #{tpu_custom_call.1} parent=5 // pred_check
        _
      $region10: #{tpu_custom_call.1} parent=5 // pred_check_branch
        %123 = sbr.rel (%p120) target = $region12
      $region11: #{tpu_custom_call.1} parent=5 // pred_region
        %s124 = ssub.s32 %s14, 1
      $region12: #{tpu_custom_call.1} parent=5 // pred_fallthru
        _
      %p125 = scmp.lt.s32.totalorder %s14, 2
      // Predicated region
      $region13: #{tpu_custom_call.1} parent=5 // pred_check
        %p126 = pneg %p125
      $region14: #{tpu_custom_call.1} parent=5 // pred_check_branch
        %128 = sbr.rel (%p126) target = $region16
      $region15: #{tpu_custom_call.1} parent=5 // pred_region
        // Predicated region
        $region17: #{tpu_custom_call.1} parent=15 // pred_check
          %p129 = pneg %p48
        $region18: #{tpu_custom_call.1} parent=15 // pred_check_branch
          %131 = sbr.rel (%p129) target = $region20
        $region19: #{tpu_custom_call.1} parent=15 // pred_region
          %s132 = smul.u32 2, %s22
          %p133 = scmp.lt.s32.totalorder %s21, 1
          %s134 = scalar_select %p133, %s21, 1
          %p135 = scmp.lt.s32.totalorder %s132, 1
          %s136 = scalar_select %p135, %s132, 1
          %s137 = smul.addr %s134, 2
          %s138 = sadd.s32 %s136, %s137
          %s139 = scalar_lea.vmem %s0, %s138
          %s140 = smul.u32 2, %s22
        $region20: #{tpu_custom_call.1} parent=15 // pred_fallthru
          _
        // Predicated region
        $region21: #{tpu_custom_call.1} parent=15 // pred_check
          %p141 = pneg %p76
        $region22: #{tpu_custom_call.1} parent=15 // pred_check_branch
          %143 = sbr.rel (%p141) target = $region24
        $region23: #{tpu_custom_call.1} parent=15 // pred_region
          %s144 = sand.u32 %s66, 1
          %s145 = scalar_lea.sflag [#allocation3], %s144
          %s146 = sand.u32 %s66, 1
          %s147 = smul.addr %s146, 8
          %s148 = scalar_lea.vmem [#allocation2], %s147
          %s149 = smul.u32 2, %s22
          %151 = vsyncadd %s145, 0
          %s152 = smul.addr %s21, 2
          %s153 = sadd.s32 %s149, %s152
          %s154 = smul.addr %s153, 4
          %s155 = scalar_lea.hbm %s1, %s154
          %s157 = sshll.u32 %s155, 4
          %s158 = int_to_ptr.hbm [resolvable:$true] %s157
          %s159 = sshll.u32 %s148, 4
          %s160 = int_to_ptr.vmem [resolvable:$true] %s159
          %162 = dma.hbm_to_vmem [thread:$0]  %s158, 128, %s160, %s145
        $region24: #{tpu_custom_call.1} parent=15 // pred_fallthru
          _
      $region16: #{tpu_custom_call.1} parent=5 // pred_fallthru
        _
      %p163 = scmp.le.s32.totalorder 1, %s14
      %p164 = scmp.lt.s32.totalorder %s14, 3
      %p165 = pnand %p163, %p164
      %p166 = pneg %p165
      // Predicated region
      $region25: #{tpu_custom_call.1} parent=5 // pred_check
        _
      $region26: #{tpu_custom_call.1} parent=5 // pred_check_branch
        %168 = sbr.rel (%p165) target = $region28
      $region27: #{tpu_custom_call.1} parent=5 // pred_region
        %s169 = ssub.s32 %s14, 1
        %s170 = sand.u32 %s69, 1
        %s171 = scalar_lea.sflag [#allocation3], %s170
        %s172 = sand.u32 %s69, 1
        %s173 = smul.addr %s172, 8
        %s174 = scalar_lea.vmem [#allocation2], %s173
        // Predicated region
        $region29: #{tpu_custom_call.1} parent=27 // pred_check
          %p175 = pneg %p82
        $region30: #{tpu_custom_call.1} parent=27 // pred_check_branch
          %177 = sbr.rel (%p175) target = $region32
        $region31: #{tpu_custom_call.1} parent=27 // pred_region
          %179 = dma.done %s171, 128
        $region32: #{tpu_custom_call.1} parent=27 // pred_fallthru
          _
        %s180 = smul.u32 2, %s24
        %p181 = scmp.lt.s32.totalorder %s23, 1
        %s182 = scalar_select %p181, %s23, 1
        %p183 = scmp.lt.s32.totalorder %s180, 1
        %s184 = scalar_select %p183, %s180, 1
        %s185 = smul.addr %s182, 2
        %s186 = sadd.s32 %s184, %s185
        %s187 = scalar_lea.vmem %s0, %s186
        %p188 = pneg %p54
        %p189 = pneg %p51
        %s190 = sand.u32 %s69, 1
        %s191 = scalar_lea.sflag [#allocation3], %s190
        %s192 = sand.u32 %s69, 1
        %s193 = smul.addr %s192, 8
        %s194 = scalar_lea.vmem [#allocation2], %s193
        %p195 = pneg %p82
        %p196 = pneg %p79
        %p197 = pneg %p110
        %p198 = pneg %p107
        %s199 = sand.u32 %s97, 1
        %s200 = scalar_lea.sflag [#allocation4], %s199
        %s201 = sand.u32 %s97, 1
        %s202 = smul.addr %s201, 2
        %s203 = scalar_lea.vmem [#allocation5], %s202
        %s204 = smul.u32 2, %s24
        %p205 = scmp.lt.s32.totalorder %s23, 1
        %s206 = scalar_select %p205, %s23, 1
        %p207 = scmp.lt.s32.totalorder %s204, 1
        %s208 = scalar_select %p207, %s204, 1
        %s209 = smul.addr %s206, 2
        %s210 = sadd.s32 %s208, %s209
        %s211 = scalar_lea.vmem %s0, %s210
        %s212 = smul.u32 2, %s24
        %s213 = smul.u32 2, %s24
        %v214 = vld [vmem:[%s174] sm:$0xff]
        %v215 = vld [vmem:[%s211] sm:$0x3]
        %v216 = vunpack.c.0.s8 %v215
        %v217 = vlaneseq
        %v218 = vshrl.u32 %v217, 7
        %v219 = vperm.slane %v216, 0
        %v220 = vperm.slane %v216, 4
        %v221 = vperm.slane %v219, 0
        %v222 = vperm.slane %v220, 0
        %vm223 = vcmp.eq.s32.totalorder %v218, %v221
        %vm224 = vcmp.eq.s32.totalorder %v218, %v222
        %226 = vst [vmem:[#allocation1] ss:$2 sm:$0xff] %v214
        %v227 = vld.sshfl [vmem:[#allocation1] sm:$0xff pattern:$0x75316420]
        %v228 = vld.sshfl [vmem:[#allocation1 + $0x8] sm:$0xff pattern:$0x75316420]
        %v231 = vsel %vm223, %v227, 0.0
        %v232 = vsel %vm224, %v228, 0.0
        %vm233 = vcmask 1043456
        %v234 = vsel %vm233, %v231, 0.0
        %v235 = vrot.slane %v234, 4
        %v236 = vadd.f32 %v234, %v235
        %v237 = vrot.slane %v236, 2
        %v238 = vadd.f32 %v236, %v237
        %v239 = vrot.slane %v238, 1
        %v240 = vadd.f32 %v238, %v239
        %v241 = vsel %vm233, %v232, 0.0
        %v242 = vrot.slane %v241, 4
        %v243 = vadd.f32 %v241, %v242
        %v244 = vrot.slane %v243, 2
        %v245 = vadd.f32 %v243, %v244
        %v246 = vrot.slane %v245, 1
        %v247 = vadd.f32 %v245, %v246
        %v250 = vrot.slane %v247, 4
        %v251 = vsel %vm233, %v240, %v250
        %vm253 = vcmp.gt.f32.partialorder %v214, %v251
        %vm254 = vcmp.eq.f32.partialorder %v214, %v251
        %vm255 = vcmp.lt.s32.totalorder %v218, %v221
        %vm256 = vcmp.lt.s32.totalorder %v218, %v222
        %v257 = vsel %vm255, 1, 0
        %v258 = vsel %vm256, 1, 0
        %v259 = vrot.slane %v258, 4
        %v260 = vsel %vm233, %v257, %v259
        %vm261 = vcmp.ne.s32.totalorder %v260, 0
        %vm262 = vmand %vm254, %vm261
        %vm263 = vmor %vm253, %vm262
        %v264 = vsel %vm263, 1, 0
        %265 = vst [vmem:[#allocation1] ss:$2 sm:$0xff] %v264
        %v266 = vld.sshfl [vmem:[#allocation1] sm:$0xff pattern:$0x75316420]
        %v267 = vld.sshfl [vmem:[#allocation1 + $0x8] sm:$0xff pattern:$0x75316420]
        %v268 = vsel %vm233, %v266, 0
        %v269 = vrot.slane %v268, 4
        %v270 = vadd.s32 %v268, %v269
        %v271 = vrot.slane %v270, 2
        %v272 = vadd.s32 %v270, %v271
        %v273 = vrot.slane %v272, 1
        %v274 = vadd.s32 %v272, %v273
        %v275 = vsel %vm233, %v267, 0
        %v276 = vrot.slane %v275, 4
        %v277 = vadd.s32 %v275, %v276
        %v278 = vrot.slane %v277, 2
        %v279 = vadd.s32 %v277, %v278
        %v280 = vrot.slane %v279, 1
        %v281 = vadd.s32 %v279, %v280
        %vm282 = vcmp.lt.s32.totalorder %v274, 1
        %vm283 = vcmp.lt.s32.totalorder %v281, 1
        %v284 = vsel %vm282, 1, 0
        %v285 = vsel %vm283, 1, 0
        %v286 = vcvt.s32.f32 %v284
        %v287 = vcvt.s32.f32 %v285
        %v288 = vadd.f32 %v286, %v287
        %vm289 = vcmask 1040384
        %v290 = vsel %vm289, %v288, 2.0
        %291 = vst [vmem:[%s203] sm:$0x3] %v290
        %s292 = sand.u32 %s97, 1
        %s293 = scalar_lea.sflag [#allocation4], %s292
        %s294 = sand.u32 %s97, 1
        %s295 = smul.addr %s294, 2
        %s296 = scalar_lea.vmem [#allocation5], %s295
        // Predicated region
        $region33: #{tpu_custom_call.1} parent=27 // pred_check
          %p297 = pneg %p107
        $region34: #{tpu_custom_call.1} parent=27 // pred_check_branch
          %299 = sbr.rel (%p297) target = $region36
        $region35: #{tpu_custom_call.1} parent=27 // pred_region
          %301 = vsyncadd %s293, 0
          %s302 = sadd.s32 %s24, %s23
          %s303 = smul.addr %s302, 2
          %s304 = scalar_lea.hbm %s2, %s303
          %s306 = sshll.u32 %s296, 4
          %s307 = int_to_ptr.vmem [resolvable:$true] %s306
          %s308 = sshll.u32 %s304, 4
          %s309 = int_to_ptr.hbm [resolvable:$true] %s308
          %311 = dma.vmem_to_hbm [thread:$0]  %s307, 32, %s309, %s293
        $region36: #{tpu_custom_call.1} parent=27 // pred_fallthru
          _
      $region28: #{tpu_custom_call.1} parent=5 // pred_fallthru
        _
      %p312 = scmp.le.s32.totalorder 2, %s14
      // Predicated region
      $region37: #{tpu_custom_call.1} parent=5 // pred_check
        %p313 = pneg %p312
      $region38: #{tpu_custom_call.1} parent=5 // pred_check_branch
        %315 = sbr.rel (%p313) target = $region40
      $region39: #{tpu_custom_call.1} parent=5 // pred_region
        %s316 = ssub.s32 %s14, 2
        // Predicated region
        $region41: #{tpu_custom_call.1} parent=39 // pred_check
          %p317 = pneg %p113
        $region42: #{tpu_custom_call.1} parent=39 // pred_check_branch
          %319 = sbr.rel (%p317) target = $region44
        $region43: #{tpu_custom_call.1} parent=39 // pred_region
          %s320 = sand.u32 %s98, 1
          %s321 = scalar_lea.sflag [#allocation4], %s320
          %s322 = sand.u32 %s98, 1
          %s323 = smul.addr %s322, 2
          %s324 = scalar_lea.vmem [#allocation5], %s323
          %326 = dma.done %s321, 32
        $region44: #{tpu_custom_call.1} parent=39 // pred_fallthru
          _
      $region40: #{tpu_custom_call.1} parent=5 // pred_fallthru
        _
    $region6: #{tpu_custom_call.1} parent=1 // loop_footer
      %s18 = sadd.s32 1, %s14
    $region7: #{tpu_custom_call.1} parent=1 // loop_footer_branch
      %13 = sbr.rel target = $region3
    $region8: #{tpu_custom_call.1} parent=1 // loop_exit
      _
    %327 = vsyncpa [#allocation3], 1
    %s328 = scalar_lea.sflag [#allocation3], 1
    %329 = vsyncpa %s328, 1
    %330 = vsyncpa [#allocation4], 1
    %s331 = scalar_lea.sflag [#allocation4], 1
    %332 = vsyncpa %s331, 1

</llo_original>
